<compile_context>
chip_gen: v5e
topology: v5e:2x2
jax: 0.10.0
libtpu: 0.0.40
codegen_flags: <defaults>
</compile_context>

<pallas_src>
import jax
import jax.numpy as jnp
from jax import lax
from jax.experimental import pallas as pl
from jax.experimental.pallas import tpu as pltpu

FUSION_EPS = 1e-4   # module's `eps`
BN_EPS = 1e-3       # nn.BatchNorm2d(eps=0.001)


def _make_wic_kernel(num_ins, C, H, W):
    HW = H * W

    def kernel(*refs):
        # refs = (wn_smem, x_0 ... x_{num_ins-1}, wmat, bias, out)
        wn_ref = refs[0]                       # (num_ins,)      SMEM, normalized weights
        x_refs = refs[1:1 + num_ins]           # each (C, HW)    VMEM, f32
        wmat_ref = refs[1 + num_ins]           # (Cout, 9*C)     bf16, dw*pw*bn_scale folded
        bias_ref = refs[2 + num_ins]           # (Cout, 1)       f32, pw_bias*scale + bn_shift
        o_ref = refs[3 + num_ins]              # (Cout, HW)      f32

        # ---- weighted fusion with SMEM scalar weights (relu+normalized in wrapper) ----
        xs = wn_ref[0] * x_refs[0][...]                       # (C, HW) f32, lane-dense
        for i in range(1, num_ins):
            xs = xs + wn_ref[i] * x_refs[i][...]

        # ---- swish: x * sigmoid(x) (sigmoid goes to the EUP slot) ----
        xs = xs * jax.nn.sigmoid(xs)

        # ---- build im2col^T (9*C, HW) of the 3x3 "same" window -----------------------
        # Zero-extend the flattened spatial axis by (W+1) on each side so the +/-1 ROW
        # shifts land in zeros; +/-1 COLUMN shifts that would wrap across a row boundary
        # are zeroed with lane-position masks.  All shifts are static lane offsets.
        zpad = jnp.zeros((C, W + 1), jnp.float32)
        ext = jnp.concatenate([zpad, xs, zpad], axis=1)       # (C, HW + 2*W + 2)

        wpos = lax.broadcasted_iota(jnp.int32, (1, HW), 1) % W
        mask_l = wpos >= 1                                    # valid when reading col w-1
        mask_r = wpos <= W - 2                                # valid when reading col w+1

        cols = []
        for kh in range(3):
            for kw in range(3):
                off = (W + 1) + (kh - 1) * W + (kw - 1)       # static offset in [0, 2W+2]
                tap = ext[:, off:off + HW]                    # (C, HW)
                if kw == 0:
                    tap = jnp.where(mask_l, tap, 0.0)
                elif kw == 2:
                    tap = jnp.where(mask_r, tap, 0.0)
                cols.append(tap)
        xi = jnp.concatenate(cols, axis=0)                    # (9*C, HW)

        # ---- fused depthwise+pointwise+BN as ONE MXU matmul ---------------------------
        # (Cout, 9C) @ (9C, HW) -> (Cout, HW); bf16 operands, f32 accumulation.
        z = jnp.dot(wmat_ref[...], xi.astype(jnp.bfloat16),
                    preferred_element_type=jnp.float32)
        o_ref[...] = z + bias_ref[...]                        # folded bias, broadcast on lanes

    return kernel


def weighted_input_conv_v2(inputs_nchw, params):
    """Pallas implementation of WeightedInputConv_V2.forward (separable_conv=True)."""
    num_ins = len(inputs_nchw)
    N, Cin, H, W = inputs_nchw[0].shape
    HW = H * W

    # Free reshapes NCHW -> (N, C, H*W); no transpose / stack / pad through HBM.
    xs_flat = [x.reshape(N, Cin, HW).astype(jnp.float32) for x in inputs_nchw]

    # Fusion weights: relu + normalize ONCE, passed to the kernel as SMEM scalars.
    w = jax.nn.relu(params["fusion_weight"])
    wn = (w / (jnp.sum(w) + FUSION_EPS)).astype(jnp.float32)          # (num_ins,)

    # Fold depthwise(3x3) * pointwise(1x1) * BN-scale into one (Cout, 9*Cin) matrix,
    # and pointwise-bias + BN-shift into one (Cout, 1) bias.
    dw = params["dw_weight"][:, 0, :, :]                              # (Cin, 3, 3)
    pw = params["pw_weight"][:, :, 0, 0]                              # (Cout, Cin)
    Cout = pw.shape[0]
    inv = params["bn_gamma"] / jnp.sqrt(params["bn_var"] + BN_EPS)    # (Cout,)
    dw_t = jnp.transpose(dw, (1, 2, 0)).reshape(9, Cin)               # [kh*3+kw, c]
    wmat = (pw[:, None, :] * dw_t[None, :, :]) * inv[:, None, None]   # (Cout, 9, Cin)
    wmat = wmat.reshape(Cout, 9 * Cin).astype(jnp.bfloat16)           # bf16 MXU operand
    bias = (params["pw_bias"] * inv
            + (params["bn_beta"] - params["bn_mean"] * inv)).reshape(Cout, 1)
    bias = bias.astype(jnp.float32)

    kernel = _make_wic_kernel(num_ins, Cin, H, W)

    in_specs = [pl.BlockSpec(memory_space=pltpu.MemorySpace.SMEM)]        # wn scalars
    in_specs += [pl.BlockSpec((None, Cin, HW), lambda b: (b, 0, 0))       # inputs
                 for _ in range(num_ins)]
    in_specs += [pl.BlockSpec((Cout, 9 * Cin), lambda b: (0, 0)),         # folded weights
                 pl.BlockSpec((Cout, 1), lambda b: (0, 0))]               # folded bias

    out_flat = pl.pallas_call(
        kernel,
        out_shape=jax.ShapeDtypeStruct((N, Cout, HW), jnp.float32),
        grid=(N,),
        in_specs=in_specs,
        out_specs=pl.BlockSpec((None, Cout, HW), lambda b: (b, 0, 0)),    # lane-dense store
        compiler_params=pltpu.CompilerParams(dimension_semantics=("parallel",)),
    )(wn, *xs_flat, wmat, bias)

    # Free reshape back to NCHW (kernel already produced channels-first output).
    return out_flat.reshape(N, Cout, H, W)


def reference_nchw(inputs_nchw, params):
    """Pure-JAX (XLA) reference of the PyTorch forward, for correctness checking."""
    Cin = inputs_nchw[0].shape[1]
    w = jax.nn.relu(params["fusion_weight"])
    w = w / (jnp.sum(w) + FUSION_EPS)
    x = sum(w[i] * inputs_nchw[i] for i in range(len(inputs_nchw)))
    x = x * jax.nn.sigmoid(x)
    x = jnp.pad(x, ((0, 0), (0, 0), (1, 1), (1, 1)))
    y = lax.conv_general_dilated(
        x, params["dw_weight"], (1, 1), "VALID",
        dimension_numbers=("NCHW", "OIHW", "NCHW"), feature_group_count=Cin)
    z = lax.conv_general_dilated(
        y, params["pw_weight"], (1, 1), "VALID",
        dimension_numbers=("NCHW", "OIHW", "NCHW"))
    z = z + params["pw_bias"].reshape(1, -1, 1, 1)
    inv = params["bn_gamma"] / jnp.sqrt(params["bn_var"] + BN_EPS)
    z = (z - params["bn_mean"].reshape(1, -1, 1, 1)) * inv.reshape(1, -1, 1, 1) \
        + params["bn_beta"].reshape(1, -1, 1, 1)
    return z


if __name__ == "__main__":
    N, Cin, Cout, H, W, num_ins = 2, 8, 16, 16, 16, 3

    key = jax.random.PRNGKey(0)
    keys = jax.random.split(key, 10)
    inputs = [jax.random.normal(keys[i], (N, Cin, H, W), jnp.float32)
              for i in range(num_ins)]

    params = dict(
        fusion_weight=jnp.ones((num_ins,), jnp.float32),  # torch: Tensor(num_ins).fill_(1.0)
        dw_weight=0.2 * jax.random.normal(keys[3], (Cin, 1, 3, 3), jnp.float32),
        pw_weight=0.2 * jax.random.normal(keys[4], (Cout, Cin, 1, 1), jnp.float32),
        pw_bias=0.1 * jax.random.normal(keys[5], (Cout,), jnp.float32),
        bn_gamma=1.0 + 0.1 * jax.random.normal(keys[6], (Cout,), jnp.float32),
        bn_beta=0.1 * jax.random.normal(keys[7], (Cout,), jnp.float32),
        bn_mean=0.05 * jax.random.normal(keys[8], (Cout,), jnp.float32),
        bn_var=1.0 + 0.1 * jnp.abs(jax.random.normal(keys[9], (Cout,), jnp.float32)),
    )

    out = weighted_input_conv_v2(inputs, params)
    out = jax.block_until_ready(out)

    ref = reference_nchw(inputs, params)
    assert out.shape == (N, Cout, H, W), out.shape
    if not jnp.allclose(out, ref, rtol=1e-2, atol=1e-2):
        raise AssertionError(
            f"mismatch: max abs err = {float(jnp.max(jnp.abs(out - ref)))}")

    print("KERNEL_OK")
</pallas_src>

<mosaic_0001>
module attributes {stable_mosaic.version = 11 : i64} {
  func.func @kernel(%arg0: i32, %arg1: memref<3xf32, #tpu.memory_space<smem>>, %arg2: memref<1x8x256xf32, #tpu.memory_space<vmem>>, %arg3: memref<1x8x256xf32, #tpu.memory_space<vmem>>, %arg4: memref<1x8x256xf32, #tpu.memory_space<vmem>>, %arg5: memref<16x72xbf16, #tpu.memory_space<vmem>>, %arg6: memref<16x1xf32, #tpu.memory_space<vmem>>, %arg7: memref<1x16x256xf32, #tpu.memory_space<vmem>>) attributes {dimension_semantics = [#tpu.dimension_semantics<parallel>], iteration_bounds = array<i64: 2>, scalar_prefetch = 0 : i64, scratch_operands = 0 : i64, tpu.core_type = #tpu.core_type<tc>, window_params = [{transform_indices = @transform_0, window_bounds = array<i64: 3>}, {transform_indices = @transform_1, window_bounds = array<i64: 1, 8, 256>}, {transform_indices = @transform_2, window_bounds = array<i64: 1, 8, 256>}, {transform_indices = @transform_3, window_bounds = array<i64: 1, 8, 256>}, {pipeline_mode = #tpu.pipeline_mode<synchronous>, transform_indices = @transform_4, window_bounds = array<i64: 16, 72>}, {pipeline_mode = #tpu.pipeline_mode<synchronous>, transform_indices = @transform_5, window_bounds = array<i64: 16, 1>}, {transform_indices = @transform_6, window_bounds = array<i64: 1, 16, 256>}]} {
    %c0 = arith.constant 0 : index
    %0 = memref.load %arg1[%c0] : memref<3xf32, #tpu.memory_space<smem>>
    %c0_0 = arith.constant 0 : index
    %c0_1 = arith.constant 0 : index
    %c0_2 = arith.constant 0 : index
    %1 = vector.load %arg2[%c0_0, %c0_1, %c0_2] : memref<1x8x256xf32, #tpu.memory_space<vmem>>, vector<1x8x256xf32>
    %2 = vector.shape_cast %1 : vector<1x8x256xf32> to vector<8x256xf32>
    %3 = vector.broadcast %0 : f32 to vector<8x256xf32>
    %4 = arith.mulf %3, %2 : vector<8x256xf32>
    %c1 = arith.constant 1 : index
    %5 = memref.load %arg1[%c1] : memref<3xf32, #tpu.memory_space<smem>>
    %c0_3 = arith.constant 0 : index
    %c0_4 = arith.constant 0 : index
    %c0_5 = arith.constant 0 : index
    %6 = vector.load %arg3[%c0_3, %c0_4, %c0_5] : memref<1x8x256xf32, #tpu.memory_space<vmem>>, vector<1x8x256xf32>
    %7 = vector.shape_cast %6 : vector<1x8x256xf32> to vector<8x256xf32>
    %8 = vector.broadcast %5 : f32 to vector<8x256xf32>
    %9 = arith.mulf %8, %7 : vector<8x256xf32>
    %10 = arith.addf %4, %9 : vector<8x256xf32>
    %c2 = arith.constant 2 : index
    %11 = memref.load %arg1[%c2] : memref<3xf32, #tpu.memory_space<smem>>
    %c0_6 = arith.constant 0 : index
    %c0_7 = arith.constant 0 : index
    %c0_8 = arith.constant 0 : index
    %12 = vector.load %arg4[%c0_6, %c0_7, %c0_8] : memref<1x8x256xf32, #tpu.memory_space<vmem>>, vector<1x8x256xf32>
    %13 = vector.shape_cast %12 : vector<1x8x256xf32> to vector<8x256xf32>
    %14 = vector.broadcast %11 : f32 to vector<8x256xf32>
    %15 = arith.mulf %14, %13 : vector<8x256xf32>
    %16 = arith.addf %10, %15 : vector<8x256xf32>
    %17 = arith.negf %16 : vector<8x256xf32>
    %18 = math.exp %17 : vector<8x256xf32>
    %cst = arith.constant 1.000000e+00 : f32
    %19 = vector.broadcast %cst : f32 to vector<8x256xf32>
    %20 = arith.addf %19, %18 : vector<8x256xf32>
    %21 = arith.divf %19, %20 : vector<8x256xf32>
    %22 = arith.mulf %16, %21 : vector<8x256xf32>
    %cst_9 = arith.constant 0.000000e+00 : f32
    %23 = vector.broadcast %cst_9 : f32 to vector<8x17xf32>
    %24 = tpu.concatenate %23, %22, %23 in 1 : vector<8x17xf32>, vector<8x256xf32>, vector<8x17xf32> -> vector<8x290xf32>
    %25 = tpu.iota {dimensions = array<i32: 1>} : vector<1x256xi32>
    %c16_i32 = arith.constant 16 : i32
    %c0_i32 = arith.constant 0 : i32
    %26 = arith.cmpi eq, %c16_i32, %c0_i32 : i32
    %c1_i32 = arith.constant 1 : i32
    %27 = arith.select %26, %c1_i32, %c16_i32 : i32
    %28 = vector.broadcast %27 : i32 to vector<1x256xi32>
    %29 = arith.remsi %25, %28 : vector<1x256xi32>
    %c0_i32_10 = arith.constant 0 : i32
    %30 = vector.broadcast %c0_i32_10 : i32 to vector<1x256xi32>
    %31 = arith.cmpi ne, %29, %30 : vector<1x256xi32>
    %c0_i32_11 = arith.constant 0 : i32
    %32 = vector.broadcast %c0_i32_11 : i32 to vector<1x256xi32>
    %33 = arith.cmpi slt, %29, %32 : vector<1x256xi32>
    %c0_i32_12 = arith.constant 0 : i32
    %34 = arith.cmpi slt, %27, %c0_i32_12 : i32
    %35 = vector.broadcast %34 : i1 to vector<1x256xi1>
    %36 = vector.broadcast %35 : vector<1x256xi1> to vector<1x256xi1>
    %37 = arith.xori %33, %36 : vector<1x256xi1>
    %38 = arith.andi %37, %31 : vector<1x256xi1>
    %39 = vector.broadcast %27 : i32 to vector<1x256xi32>
    %40 = arith.addi %29, %39 : vector<1x256xi32>
    %41 = arith.select %38, %40, %29 : vector<1x256xi1>, vector<1x256xi32>
    %c1_i32_13 = arith.constant 1 : i32
    %42 = vector.broadcast %c1_i32_13 : i32 to vector<1x256xi32>
    %43 = arith.cmpi sge, %41, %42 : vector<1x256xi32>
    %c14_i32 = arith.constant 14 : i32
    %44 = vector.broadcast %c14_i32 : i32 to vector<1x256xi32>
    %45 = arith.cmpi sle, %41, %44 : vector<1x256xi32>
    %46 = vector.extract_strided_slice %24 {offsets = [0, 0], sizes = [8, 256], strides = [1, 1]} : vector<8x290xf32> to vector<8x256xf32>
    %cst_14 = arith.constant 0.000000e+00 : f32
    %47 = vector.shape_cast %43 : vector<1x256xi1> to vector<1x256xi1>
    %48 = vector.broadcast %47 : vector<1x256xi1> to vector<8x256xi1>
    %49 = vector.broadcast %cst_14 : f32 to vector<8x256xf32>
    %50 = arith.select %48, %46, %49 : vector<8x256xi1>, vector<8x256xf32>
    %51 = vector.extract_strided_slice %24 {offsets = [0, 1], sizes = [8, 256], strides = [1, 1]} : vector<8x290xf32> to vector<8x256xf32>
    %52 = vector.extract_strided_slice %24 {offsets = [0, 2], sizes = [8, 256], strides = [1, 1]} : vector<8x290xf32> to vector<8x256xf32>
    %cst_15 = arith.constant 0.000000e+00 : f32
    %53 = vector.shape_cast %45 : vector<1x256xi1> to vector<1x256xi1>
    %54 = vector.broadcast %53 : vector<1x256xi1> to vector<8x256xi1>
    %55 = vector.broadcast %cst_15 : f32 to vector<8x256xf32>
    %56 = arith.select %54, %52, %55 : vector<8x256xi1>, vector<8x256xf32>
    %57 = vector.extract_strided_slice %24 {offsets = [0, 16], sizes = [8, 256], strides = [1, 1]} : vector<8x290xf32> to vector<8x256xf32>
    %cst_16 = arith.constant 0.000000e+00 : f32
    %58 = vector.shape_cast %43 : vector<1x256xi1> to vector<1x256xi1>
    %59 = vector.broadcast %58 : vector<1x256xi1> to vector<8x256xi1>
    %60 = vector.broadcast %cst_16 : f32 to vector<8x256xf32>
    %61 = arith.select %59, %57, %60 : vector<8x256xi1>, vector<8x256xf32>
    %62 = vector.extract_strided_slice %24 {offsets = [0, 17], sizes = [8, 256], strides = [1, 1]} : vector<8x290xf32> to vector<8x256xf32>
    %63 = vector.extract_strided_slice %24 {offsets = [0, 18], sizes = [8, 256], strides = [1, 1]} : vector<8x290xf32> to vector<8x256xf32>
    %cst_17 = arith.constant 0.000000e+00 : f32
    %64 = vector.shape_cast %45 : vector<1x256xi1> to vector<1x256xi1>
    %65 = vector.broadcast %64 : vector<1x256xi1> to vector<8x256xi1>
    %66 = vector.broadcast %cst_17 : f32 to vector<8x256xf32>
    %67 = arith.select %65, %63, %66 : vector<8x256xi1>, vector<8x256xf32>
    %68 = vector.extract_strided_slice %24 {offsets = [0, 32], sizes = [8, 256], strides = [1, 1]} : vector<8x290xf32> to vector<8x256xf32>
    %cst_18 = arith.constant 0.000000e+00 : f32
    %69 = vector.shape_cast %43 : vector<1x256xi1> to vector<1x256xi1>
    %70 = vector.broadcast %69 : vector<1x256xi1> to vector<8x256xi1>
    %71 = vector.broadcast %cst_18 : f32 to vector<8x256xf32>
    %72 = arith.select %70, %68, %71 : vector<8x256xi1>, vector<8x256xf32>
    %73 = vector.extract_strided_slice %24 {offsets = [0, 33], sizes = [8, 256], strides = [1, 1]} : vector<8x290xf32> to vector<8x256xf32>
    %74 = vector.extract_strided_slice %24 {offsets = [0, 34], sizes = [8, 256], strides = [1, 1]} : vector<8x290xf32> to vector<8x256xf32>
    %cst_19 = arith.constant 0.000000e+00 : f32
    %75 = vector.shape_cast %45 : vector<1x256xi1> to vector<1x256xi1>
    %76 = vector.broadcast %75 : vector<1x256xi1> to vector<8x256xi1>
    %77 = vector.broadcast %cst_19 : f32 to vector<8x256xf32>
    %78 = arith.select %76, %74, %77 : vector<8x256xi1>, vector<8x256xf32>
    %79 = tpu.concatenate %50, %51, %56, %61, %62, %67, %72, %73, %78 in 0 : vector<8x256xf32>, vector<8x256xf32>, vector<8x256xf32>, vector<8x256xf32>, vector<8x256xf32>, vector<8x256xf32>, vector<8x256xf32>, vector<8x256xf32>, vector<8x256xf32> -> vector<72x256xf32>
    %c0_20 = arith.constant 0 : index
    %c0_21 = arith.constant 0 : index
    %80 = vector.load %arg5[%c0_20, %c0_21] : memref<16x72xbf16, #tpu.memory_space<vmem>>, vector<16x72xbf16>
    %81 = arith.truncf %79 : vector<72x256xf32> to vector<72x256xbf16>
    %cst_22 = arith.constant dense<0.000000e+00> : vector<16x256xf32>
    %82 = tpu.matmul %80, %81, %cst_22 {dimension_numbers = #tpu.dot_dimension_numbers<[1], [0], [0], [1], [0, 0, 1, 1], [], []>} : vector<16x72xbf16>, vector<72x256xbf16>, vector<16x256xf32> -> vector<16x256xf32>
    %c0_23 = arith.constant 0 : index
    %c0_24 = arith.constant 0 : index
    %83 = vector.load %arg6[%c0_23, %c0_24] : memref<16x1xf32, #tpu.memory_space<vmem>>, vector<16x1xf32>
    %84 = vector.broadcast %83 : vector<16x1xf32> to vector<16x256xf32>
    %85 = arith.addf %82, %84 : vector<16x256xf32>
    %c0_25 = arith.constant 0 : index
    %c0_26 = arith.constant 0 : index
    %c0_27 = arith.constant 0 : index
    %86 = vector.load %arg7[%c0_25, %c0_26, %c0_27] : memref<1x16x256xf32, #tpu.memory_space<vmem>>, vector<1x16x256xf32>
    %87 = vector.shape_cast %86 : vector<1x16x256xf32> to vector<16x256xf32>
    %88 = vector.shape_cast %85 : vector<16x256xf32> to vector<1x16x256xf32>
    tpu.vector_store %arg7[%c0_25, %c0_26, %c0_27], %88 {strides = array<i32>} : memref<1x16x256xf32, #tpu.memory_space<vmem>>, vector<1x16x256xf32>,
    return
  }
  func.func @transform_0(%arg0: i32) -> i32 {
    %c0_i32 = arith.constant 0 : i32
    %c0_i32_0 = arith.constant 0 : i32
    return %c0_i32 : i32
  }
  func.func @transform_1(%arg0: i32) -> (i32, i32, i32) {
    %c0_i32 = arith.constant 0 : i32
    %c0_i32_0 = arith.constant 0 : i32
    %c0_i32_1 = arith.constant 0 : i32
    return %arg0, %c0_i32, %c0_i32_0 : i32, i32, i32
  }
  func.func @transform_2(%arg0: i32) -> (i32, i32, i32) {
    %c0_i32 = arith.constant 0 : i32
    %c0_i32_0 = arith.constant 0 : i32
    %c0_i32_1 = arith.constant 0 : i32
    return %arg0, %c0_i32, %c0_i32_0 : i32, i32, i32
  }
  func.func @transform_3(%arg0: i32) -> (i32, i32, i32) {
    %c0_i32 = arith.constant 0 : i32
    %c0_i32_0 = arith.constant 0 : i32
    %c0_i32_1 = arith.constant 0 : i32
    return %arg0, %c0_i32, %c0_i32_0 : i32, i32, i32
  }
  func.func @transform_4(%arg0: i32) -> (i32, i32) {
    %c0_i32 = arith.constant 0 : i32
    %c0_i32_0 = arith.constant 0 : i32
    %c0_i32_1 = arith.constant 0 : i32
    return %c0_i32, %c0_i32_0 : i32, i32
  }
  func.func @transform_5(%arg0: i32) -> (i32, i32) {
    %c0_i32 = arith.constant 0 : i32
    %c0_i32_0 = arith.constant 0 : i32
    %c0_i32_1 = arith.constant 0 : i32
    return %c0_i32, %c0_i32_0 : i32, i32
  }
  func.func @transform_6(%arg0: i32) -> (i32, i32, i32) {
    %c0_i32 = arith.constant 0 : i32
    %c0_i32_0 = arith.constant 0 : i32
    %c0_i32_1 = arith.constant 0 : i32
    return %arg0, %c0_i32, %c0_i32_0 : i32, i32, i32
  }
}

</mosaic_0001>

<llo_original>
// kernel: tpu_custom_call.1
$region0: #{tpu_custom_call.1}
  #allocation0 [shape = 'u32[]', space=smem, size = 0x4, offset = 0x4, fixed_abs, tag = 'smem constant byte address 0x4 - core index']
  #allocation1 [shape = 'u32[72,128]{1,0:T(1,128)}', space=vmem, size = 0x9000, scoped, tag = 'internal scratch']
  %s0 = inlined_call_operand.vmem [shape: f32[3], index: 0, kind: input, shape index: {}]
  %s1 = inlined_call_operand.hbm [shape: f32[2,8,256], index: 1, kind: input, shape index: {}]
  %s2 = inlined_call_operand.hbm [shape: f32[2,8,256], index: 2, kind: input, shape index: {}]
  %s3 = inlined_call_operand.hbm [shape: f32[2,8,256], index: 3, kind: input, shape index: {}]
  %s4 = inlined_call_operand.vmem [shape: bf16[16,72], index: 4, kind: input, shape index: {}]
  %s5 = inlined_call_operand.vmem [shape: f32[16,1], index: 5, kind: input, shape index: {}]
  %s6 = inlined_call_operand.hbm [shape: f32[2,16,256], index: 6, kind: output, shape index: {}]
  %s7 = sld [smem:[#allocation0]]
  $region73: #{tpu_custom_call.1} parent=0
    _
  %s9 = ssub.s32 1, %s7
  %s10 = scalar_select 0, %s9, %s7
  $region1: #{tpu_custom_call.1} parent=0
    #allocation2 [shape = 'u8[512]{0}', space=smem, size = 0x200, scoped, tag = 'input window, operand 0, single buffered']
    #allocation3 [shape = 's32[2]{0}', space=sflag, size = 0x8, scoped, tag = 'scoped memory for tpu_custom_call.1']
    #allocation4 [shape = 's32[2]{0}', space=sflag, size = 0x8, scoped, tag = 'scoped memory for tpu_custom_call.1']
    #allocation5 [shape = 's32[2]{0}', space=sflag, size = 0x8, scoped, tag = 'scoped memory for tpu_custom_call.1']
    #allocation6 [shape = 'u8[16384]{0}', space=vmem, size = 0x4000, scoped, tag = 'input window, operand 1']
    #allocation7 [shape = 'u8[16384]{0}', space=vmem, size = 0x4000, scoped, tag = 'input window, operand 2']
    #allocation8 [shape = 's32[2]{0}', space=sflag, size = 0x8, scoped, tag = 'scoped memory for tpu_custom_call.1']
    #allocation9 [shape = 'u8[16384]{0}', space=vmem, size = 0x4000, scoped, tag = 'input window, operand 3']
    #allocation10 [shape = 'u8[32768]{0}', space=vmem, size = 0x8000, scoped, tag = 'output window, operand 0']
    %11 = vsyncpa [#allocation5], 0
    %12 = vsyncpa [#allocation3], 0
    %s13 = scalar_lea.sflag [#allocation3], 1
    %14 = vsyncpa %s13, 0
    %15 = vsyncpa [#allocation8], 0
    %s16 = scalar_lea.sflag [#allocation8], 1
    %17 = vsyncpa %s16, 0
    %18 = vsyncpa [#allocation4], 0
    %s19 = scalar_lea.sflag [#allocation4], 1
    %20 = vsyncpa %s19, 0
    loop: start=0, step=1, limit=4
    $region2: #{tpu_custom_call.1} parent=1 // loop_pre_header
      _
    $region3: #{tpu_custom_call.1} parent=1 // loop_header
      %s22 = sphi 0, %s26
      %p23 = scmp.ge.s32.totalorder %s22, 4
      %s30 = sphi 0, %s30
      %s32 = sphi 0, %s30
      %s33 = sphi 0, %s32
      %s47 = sphi 0, %s33
      %s53 = sphi 0, %s55
      %s56 = sphi 0, %s53
      %s57 = sphi 0, %s56
      %s73 = sphi 0, %s57
      %s79 = sphi 0, %s81
      %s82 = sphi 0, %s79
      %s83 = sphi 0, %s82
      %s99 = sphi 0, %s83
      %s105 = sphi 0, %s107
      %s108 = sphi 0, %s105
      %s109 = sphi 0, %s108
      %s125 = sphi 0, %s109
      %s129 = sphi 0, %s129
      %s131 = sphi 0, %s129
      %s132 = sphi 0, %s131
      %s146 = sphi 0, %s132
      %s150 = sphi 0, %s150
      %s152 = sphi 0, %s150
      %s153 = sphi 0, %s152
      %s167 = sphi 0, %s153
      %s173 = sphi 0, %s175
      %s176 = sphi 0, %s173
      %s177 = sphi 0, %s176
      %s193 = sphi 0, %s177
    $region4: #{tpu_custom_call.1} parent=1 // loop_header_branch
      %25 = sbr.rel (%p23) target = $region8
    $region5: #{tpu_custom_call.1} parent=1 // loop_body
      %s27 = ssub.s32 %s22, 1
      %s28 = ssub.s32 %s22, 2
      %s29 = sadd.s32 %s22, 1
      %s31 = sadd.s32 %s30, 1
      %p34 = scmp.eq.s32.totalorder %s22, 1
      %p35 = scmp.ne.s32.totalorder %s30, %s32
      %p36 = scmp.eq.s32.totalorder %s22, 0
      %p37 = por %p35, %p36
      %p38 = scmp.ne.s32.totalorder %s30, %s32
      %p39 = scmp.eq.s32.totalorder %s27, 1
      %p40 = por %p38, %p39
      %p41 = scmp.ne.s32.totalorder %s32, %s33
      %p42 = scmp.eq.s32.totalorder %s27, 0
      %p43 = por %p41, %p42
      %p44 = scmp.ne.s32.totalorder %s32, %s33
      %p45 = scmp.eq.s32.totalorder %s28, 1
      %p46 = por %p44, %p45
      %p48 = scmp.ne.s32.totalorder %s33, %s47
      %p49 = scmp.eq.s32.totalorder %s28, 0
      %p50 = por %p48, %p49
      %s51 = ssub.s32 %s22, %s29
      %p52 = scmp.eq.s32.totalorder %s51, 0
      %s54 = sadd.s32 %s53, 1
      %s55 = scalar_select %p52, %s53, %s54
      %p58 = pneg %p52
      %p59 = scmp.eq.s32.totalorder %s22, 1
      %p60 = por %p58, %p59
      %p61 = scmp.ne.s32.totalorder %s53, %s56
      %p62 = scmp.eq.s32.totalorder %s22, 0
      %p63 = por %p61, %p62
      %p64 = scmp.ne.s32.totalorder %s53, %s56
      %p65 = scmp.eq.s32.totalorder %s27, 1
      %p66 = por %p64, %p65
      %p67 = scmp.ne.s32.totalorder %s56, %s57
      %p68 = scmp.eq.s32.totalorder %s27, 0
      %p69 = por %p67, %p68
      %p70 = scmp.ne.s32.totalorder %s56, %s57
      %p71 = scmp.eq.s32.totalorder %s28, 1
      %p72 = por %p70, %p71
      %p74 = scmp.ne.s32.totalorder %s57, %s73
      %p75 = scmp.eq.s32.totalorder %s28, 0
      %p76 = por %p74, %p75
      %s77 = ssub.s32 %s22, %s29
      %p78 = scmp.eq.s32.totalorder %s77, 0
      %s80 = sadd.s32 %s79, 1
      %s81 = scalar_select %p78, %s79, %s80
      %p84 = pneg %p78
      %p85 = scmp.eq.s32.totalorder %s22, 1
      %p86 = por %p84, %p85
      %p87 = scmp.ne.s32.totalorder %s79, %s82
      %p88 = scmp.eq.s32.totalorder %s22, 0
      %p89 = por %p87, %p88
      %p90 = scmp.ne.s32.totalorder %s79, %s82
      %p91 = scmp.eq.s32.totalorder %s27, 1
      %p92 = por %p90, %p91
      %p93 = scmp.ne.s32.totalorder %s82, %s83
      %p94 = scmp.eq.s32.totalorder %s27, 0
      %p95 = por %p93, %p94
      %p96 = scmp.ne.s32.totalorder %s82, %s83
      %p97 = scmp.eq.s32.totalorder %s28, 1
      %p98 = por %p96, %p97
      %p100 = scmp.ne.s32.totalorder %s83, %s99
      %p101 = scmp.eq.s32.totalorder %s28, 0
      %p102 = por %p100, %p101
      %s103 = ssub.s32 %s22, %s29
      %p104 = scmp.eq.s32.totalorder %s103, 0
      %s106 = sadd.s32 %s105, 1
      %s107 = scalar_select %p104, %s105, %s106
      %p110 = pneg %p104
      %p111 = scmp.eq.s32.totalorder %s22, 1
      %p112 = por %p110, %p111
      %p113 = scmp.ne.s32.totalorder %s105, %s108
      %p114 = scmp.eq.s32.totalorder %s22, 0
      %p115 = por %p113, %p114
      %p116 = scmp.ne.s32.totalorder %s105, %s108
      %p117 = scmp.eq.s32.totalorder %s27, 1
      %p118 = por %p116, %p117
      %p119 = scmp.ne.s32.totalorder %s108, %s109
      %p120 = scmp.eq.s32.totalorder %s27, 0
      %p121 = por %p119, %p120
      %p122 = scmp.ne.s32.totalorder %s108, %s109
      %p123 = scmp.eq.s32.totalorder %s28, 1
      %p124 = por %p122, %p123
      %p126 = scmp.ne.s32.totalorder %s109, %s125
      %p127 = scmp.eq.s32.totalorder %s28, 0
      %p128 = por %p126, %p127
      %s130 = sadd.s32 %s129, 1
      %p133 = scmp.eq.s32.totalorder %s22, 1
      %p134 = scmp.ne.s32.totalorder %s129, %s131
      %p135 = scmp.eq.s32.totalorder %s22, 0
      %p136 = por %p134, %p135
      %p137 = scmp.ne.s32.totalorder %s129, %s131
      %p138 = scmp.eq.s32.totalorder %s27, 1
      %p139 = por %p137, %p138
      %p140 = scmp.ne.s32.totalorder %s131, %s132
      %p141 = scmp.eq.s32.totalorder %s27, 0
      %p142 = por %p140, %p141
      %p143 = scmp.ne.s32.totalorder %s131, %s132
      %p144 = scmp.eq.s32.totalorder %s28, 1
      %p145 = por %p143, %p144
      %p147 = scmp.ne.s32.totalorder %s132, %s146
      %p148 = scmp.eq.s32.totalorder %s28, 0
      %p149 = por %p147, %p148
      %s151 = sadd.s32 %s150, 1
      %p154 = scmp.eq.s32.totalorder %s22, 1
      %p155 = scmp.ne.s32.totalorder %s150, %s152
      %p156 = scmp.eq.s32.totalorder %s22, 0
      %p157 = por %p155, %p156
      %p158 = scmp.ne.s32.totalorder %s150, %s152
      %p159 = scmp.eq.s32.totalorder %s27, 1
      %p160 = por %p158, %p159
      %p161 = scmp.ne.s32.totalorder %s152, %s153
      %p162 = scmp.eq.s32.totalorder %s27, 0
      %p163 = por %p161, %p162
      %p164 = scmp.ne.s32.totalorder %s152, %s153
      %p165 = scmp.eq.s32.totalorder %s28, 1
      %p166 = por %p164, %p165
      %p168 = scmp.ne.s32.totalorder %s153, %s167
      %p169 = scmp.eq.s32.totalorder %s28, 0
      %p170 = por %p168, %p169
      %s171 = ssub.s32 %s22, %s29
      %p172 = scmp.eq.s32.totalorder %s171, 0
      %s174 = sadd.s32 %s173, 1
      %s175 = scalar_select %p172, %s173, %s174
      %p178 = pneg %p172
      %p179 = scmp.eq.s32.totalorder %s22, 1
      %p180 = por %p178, %p179
      %p181 = scmp.ne.s32.totalorder %s173, %s176
      %p182 = scmp.eq.s32.totalorder %s22, 0
      %p183 = por %p181, %p182
      %p184 = scmp.ne.s32.totalorder %s173, %s176
      %p185 = scmp.eq.s32.totalorder %s27, 1
      %p186 = por %p184, %p185
      %p187 = scmp.ne.s32.totalorder %s176, %s177
      %p188 = scmp.eq.s32.totalorder %s27, 0
      %p189 = por %p187, %p188
      %p190 = scmp.ne.s32.totalorder %s176, %s177
      %p191 = scmp.eq.s32.totalorder %s28, 1
      %p192 = por %p190, %p191
      %p194 = scmp.ne.s32.totalorder %s177, %s193
      %p195 = scmp.eq.s32.totalorder %s28, 0
      %p196 = por %p194, %p195
      %p197 = scmp.le.s32.totalorder 1, %s22
      %p198 = scmp.lt.s32.totalorder %s22, 3
      %p199 = pnand %p197, %p198
      %p200 = pneg %p199
      // Predicated region
      $region9: #{tpu_custom_call.1} parent=5 // pred_check
        _
      $region10: #{tpu_custom_call.1} parent=5 // pred_check_branch
        %202 = sbr.rel (%p199) target = $region12
      $region11: #{tpu_custom_call.1} parent=5 // pred_region
        %s203 = ssub.s32 %s22, 1
        // Predicated region
        $region13: #{tpu_custom_call.1} parent=11 // pred_check
          %p204 = pneg %p43
        $region14: #{tpu_custom_call.1} parent=11 // pred_check_branch
          %206 = sbr.rel (%p204) target = $region16
        $region15: #{tpu_custom_call.1} parent=11 // pred_region
          %208 = vsyncadd [#allocation5], 0
          %s210 = sshll.u32 %s0, 4
          %s211 = int_to_ptr.vmem [resolvable:$true] %s210
          %213 = dma.vmem_to_smem %s211, 16, [#allocation2], [#allocation5]
        $region16: #{tpu_custom_call.1} parent=11 // pred_fallthru
          _
        // Predicated region
        $region17: #{tpu_custom_call.1} parent=11 // pred_check
          %p214 = pneg %p142
        $region18: #{tpu_custom_call.1} parent=11 // pred_check_branch
          %216 = sbr.rel (%p214) target = $region20
        $region19: #{tpu_custom_call.1} parent=11 // pred_region
          _
        $region20: #{tpu_custom_call.1} parent=11 // pred_fallthru
          _
        // Predicated region
        $region21: #{tpu_custom_call.1} parent=11 // pred_check
          %p217 = pneg %p163
        $region22: #{tpu_custom_call.1} parent=11 // pred_check_branch
          %219 = sbr.rel (%p217) target = $region24
        $region23: #{tpu_custom_call.1} parent=11 // pred_region
          _
        $region24: #{tpu_custom_call.1} parent=11 // pred_fallthru
          _
      $region12: #{tpu_custom_call.1} parent=5 // pred_fallthru
        _
      %p220 = scmp.lt.s32.totalorder %s22, 2
      // Predicated region
      $region25: #{tpu_custom_call.1} parent=5 // pred_check
        %p221 = pneg %p220
      $region26: #{tpu_custom_call.1} parent=5 // pred_check_branch
        %223 = sbr.rel (%p221) target = $region28
      $region27: #{tpu_custom_call.1} parent=5 // pred_region
        // Predicated region
        $region29: #{tpu_custom_call.1} parent=27 // pred_check
          %p224 = pneg %p63
        $region30: #{tpu_custom_call.1} parent=27 // pred_check_branch
          %226 = sbr.rel (%p224) target = $region32
        $region31: #{tpu_custom_call.1} parent=27 // pred_region
          %s227 = sand.u32 %s53, 1
          %s228 = scalar_lea.sflag [#allocation3], %s227
          %s229 = sand.u32 %s53, 1
          %s230 = smul.addr %s229, 16
          %s231 = scalar_lea.vmem [#allocation6], %s230
          %233 = vsyncadd %s228, 0
          %s234 = smul.addr %s22, 2
          %s235 = smul.addr %s234, 8
          %s236 = scalar_lea.hbm %s1, %s235
          %s238 = sshll.u32 %s236, 4
          %s239 = int_to_ptr.hbm [resolvable:$true] %s238
          %s240 = sshll.u32 %s231, 4
          %s241 = int_to_ptr.vmem [resolvable:$true] %s240
          %243 = dma.hbm_to_vmem [thread:$0]  %s239, 256, %s241, %s228
        $region32: #{tpu_custom_call.1} parent=27 // pred_fallthru
          _
        // Predicated region
        $region33: #{tpu_custom_call.1} parent=27 // pred_check
          %p244 = pneg %p89
        $region34: #{tpu_custom_call.1} parent=27 // pred_check_branch
          %246 = sbr.rel (%p244) target = $region36
        $region35: #{tpu_custom_call.1} parent=27 // pred_region
          %s247 = sand.u32 %s22, 1
          %s248 = scalar_lea.sflag [#allocation8], %s247
          %s249 = sand.u32 %s79, 1
          %s250 = smul.addr %s249, 16
          %s251 = scalar_lea.vmem [#allocation7], %s250
          %253 = vsyncadd %s248, 0
          %s254 = smul.addr %s22, 2
          %s255 = smul.addr %s254, 8
          %s256 = scalar_lea.hbm %s2, %s255
          %s258 = sshll.u32 %s256, 4
          %s259 = int_to_ptr.hbm [resolvable:$true] %s258
          %s260 = sshll.u32 %s251, 4
          %s261 = int_to_ptr.vmem [resolvable:$true] %s260
          %263 = dma.hbm_to_vmem [thread:$0]  %s259, 256, %s261, %s248
        $region36: #{tpu_custom_call.1} parent=27 // pred_fallthru
          _
        // Predicated region
        $region37: #{tpu_custom_call.1} parent=27 // pred_check
          %p264 = pneg %p115
        $region38: #{tpu_custom_call.1} parent=27 // pred_check_branch
          %266 = sbr.rel (%p264) target = $region40
        $region39: #{tpu_custom_call.1} parent=27 // pred_region
          %s267 = sand.u32 %s22, 1
          %s268 = scalar_lea.sflag [#allocation8], %s267
          %s269 = sand.u32 %s105, 1
          %s270 = smul.addr %s269, 16
          %s271 = scalar_lea.vmem [#allocation9], %s270
          %273 = vsyncadd %s268, 0
          %s274 = smul.addr %s22, 2
          %s275 = smul.addr %s274, 8
          %s276 = scalar_lea.hbm %s3, %s275
          %s278 = sshll.u32 %s276, 4
          %s279 = int_to_ptr.hbm [resolvable:$true] %s278
          %s280 = sshll.u32 %s271, 4
          %s281 = int_to_ptr.vmem [resolvable:$true] %s280
          %283 = dma.hbm_to_vmem [thread:$0]  %s279, 256, %s281, %s268
        $region40: #{tpu_custom_call.1} parent=27 // pred_fallthru
          _
      $region28: #{tpu_custom_call.1} parent=5 // pred_fallthru
        _
      %p284 = scmp.le.s32.totalorder 1, %s22
      %p285 = scmp.lt.s32.totalorder %s22, 3
      %p286 = pnand %p284, %p285
      %p287 = pneg %p286
      // Predicated region
      $region41: #{tpu_custom_call.1} parent=5 // pred_check
        _
      $region42: #{tpu_custom_call.1} parent=5 // pred_check_branch
        %289 = sbr.rel (%p286) target = $region44
      $region43: #{tpu_custom_call.1} parent=5 // pred_region
        %s290 = ssub.s32 %s22, 1
        // Predicated region
        $region45: #{tpu_custom_call.1} parent=43 // pred_check
          %p291 = pneg %p43
        $region46: #{tpu_custom_call.1} parent=43 // pred_check_branch
          %293 = sbr.rel (%p291) target = $region48
        $region47: #{tpu_custom_call.1} parent=43 // pred_region
          %295 = dma.done [#allocation5], 16
        $region48: #{tpu_custom_call.1} parent=43 // pred_fallthru
          _
        %s296 = sand.u32 %s56, 1
        %s297 = scalar_lea.sflag [#allocation3], %s296
        %s298 = sand.u32 %s56, 1
        %s299 = smul.addr %s298, 16
        %s300 = scalar_lea.vmem [#allocation6], %s299
        // Predicated region
        $region49: #{tpu_custom_call.1} parent=43 // pred_check
          %p301 = pneg %p69
        $region50: #{tpu_custom_call.1} parent=43 // pred_check_branch
          %303 = sbr.rel (%p301) target = $region52
        $region51: #{tpu_custom_call.1} parent=43 // pred_region
          %305 = dma.done %s297, 256
        $region52: #{tpu_custom_call.1} parent=43 // pred_fallthru
          _
        %s306 = sand.u32 %s27, 1
        %s307 = scalar_lea.sflag [#allocation8], %s306
        %s308 = sand.u32 %s82, 1
        %s309 = smul.addr %s308, 16
        %s310 = scalar_lea.vmem [#allocation7], %s309
        // Predicated region
        $region53: #{tpu_custom_call.1} parent=43 // pred_check
          %p311 = pneg %p95
        $region54: #{tpu_custom_call.1} parent=43 // pred_check_branch
          %313 = sbr.rel (%p311) target = $region56
        $region55: #{tpu_custom_call.1} parent=43 // pred_region
          %315 = dma.done %s307, 256
        $region56: #{tpu_custom_call.1} parent=43 // pred_fallthru
          _
        %s316 = sand.u32 %s27, 1
        %s317 = scalar_lea.sflag [#allocation8], %s316
        %s318 = sand.u32 %s108, 1
        %s319 = smul.addr %s318, 16
        %s320 = scalar_lea.vmem [#allocation9], %s319
        // Predicated region
        $region57: #{tpu_custom_call.1} parent=43 // pred_check
          %p321 = pneg %p121
        $region58: #{tpu_custom_call.1} parent=43 // pred_check_branch
          %323 = sbr.rel (%p321) target = $region60
        $region59: #{tpu_custom_call.1} parent=43 // pred_region
          %325 = dma.done %s317, 256
        $region60: #{tpu_custom_call.1} parent=43 // pred_fallthru
          _
        %326 = sfence
        %p327 = pneg %p43
        %p328 = pneg %p40
        %s329 = sand.u32 %s56, 1
        %s330 = scalar_lea.sflag [#allocation3], %s329
        %s331 = sand.u32 %s56, 1
        %s332 = smul.addr %s331, 16
        %s333 = scalar_lea.vmem [#allocation6], %s332
        %p334 = pneg %p69
        %p335 = pneg %p66
        %s336 = sand.u32 %s27, 1
        %s337 = scalar_lea.sflag [#allocation8], %s336
        %s338 = sand.u32 %s82, 1
        %s339 = smul.addr %s338, 16
        %s340 = scalar_lea.vmem [#allocation7], %s339
        %p341 = pneg %p95
        %p342 = pneg %p92
        %s343 = sand.u32 %s27, 1
        %s344 = scalar_lea.sflag [#allocation8], %s343
        %s345 = sand.u32 %s108, 1
        %s346 = smul.addr %s345, 16
        %s347 = scalar_lea.vmem [#allocation9], %s346
        %p348 = pneg %p121
        %p349 = pneg %p118
        %p350 = pneg %p142
        %p351 = pneg %p139
        %p352 = pneg %p163
        %p353 = pneg %p160
        %p354 = pneg %p189
        %p355 = pneg %p186
        %s356 = sand.u32 %s176, 1
        %s357 = scalar_lea.sflag [#allocation4], %s356
        %s358 = sand.u32 %s176, 1
        %s359 = smul.addr %s358, 32
        %s360 = scalar_lea.vmem [#allocation10], %s359
        %s362 = sld [smem:[#allocation2]]
        %v363 = vld [vmem:[%s300] sm:$0xff]
        %v364 = vld [vmem:[%s300 + $0x8] sm:$0xff]
        %v365 = vstv %s362
        %v366 = vmul.f32 %v365, %v363
        %v367 = vmul.f32 %v365, %v364
        %s368 = sld [smem:[#allocation2 + $0x1]]
        %v369 = vld [vmem:[%s310] sm:$0xff]
        %v370 = vld [vmem:[%s310 + $0x8] sm:$0xff]
        %v371 = vstv %s368
        %v372 = vmul.f32 %v371, %v369
        %v373 = vmul.f32 %v371, %v370
        %v374 = vadd.f32 %v366, %v372
        %v375 = vadd.f32 %v367, %v373
        %s376 = sld [smem:[#allocation2 + $0x2]]
        %v377 = vld [vmem:[%s320] sm:$0xff]
        %v378 = vld [vmem:[%s320 + $0x8] sm:$0xff]
        %v379 = vstv %s376
        %v380 = vmul.f32 %v379, %v377
        %v381 = vmul.f32 %v379, %v378
        %v382 = vadd.f32 %v374, %v380
        %v383 = vadd.f32 %v375, %v381
        %v384 = vxor.u32 %v382, 2147483648
        %v385 = vxor.u32 %v383, 2147483648
        %v386 = vmul.f32 %v384, 1.442695
        %v387 = vpow.pop %v386
        %v388 = vmul.f32 %v385, 1.442695
        %v389 = vpow.pop %v388
        %v390 = vadd.f32 %v387, 1.0
        %v391 = vadd.f32 %v389, 1.0
        %v392 = vrcp.pop %v390
        %v393 = vmul.f32 %v390, %v392
        %v394 = vsub.f32 1.0, %v393
        %v395 = vmul.f32 %v392, %v394
        %v396 = vadd.f32 %v392, %v395
        %vm397 = vweird.f32 %v390
        %vm398 = vweird.f32 %v392
        %vm399 = vmor %vm397, %vm398
        %v400 = vsel %vm399, %v392, %v396
        %v401 = vand.u32 2147483647, %v390
        %vm402 = vcmp.eq.f32.partialorder %v401, 8.507059e+37
        %v403 = vand.u32 %v390, 2147483648
        %v404 = vor.u32 1.1754944e-38, %v403
        %v405 = vsel %vm402, %v404, %v400
        %v406 = vmul.f32 1.0, %v405
        %v407 = vrcp.pop %v391
        %v408 = vmul.f32 %v391, %v407
        %v409 = vsub.f32 1.0, %v408
        %v410 = vmul.f32 %v407, %v409
        %v411 = vadd.f32 %v407, %v410
        %vm412 = vweird.f32 %v391
        %vm413 = vweird.f32 %v407
        %vm414 = vmor %vm412, %vm413
        %v415 = vsel %vm414, %v407, %v411
        %v416 = vand.u32 2147483647, %v391
        %vm417 = vcmp.eq.f32.partialorder %v416, 8.507059e+37
        %v418 = vand.u32 %v391, 2147483648
        %v419 = vor.u32 1.1754944e-38, %v418
        %v420 = vsel %vm417, %v419, %v415
        %v421 = vmul.f32 1.0, %v420
        %v422 = vmul.f32 %v382, %v406
        %v423 = vmul.f32 %v383, %v421
        %426 = vrot.lane.b32.xlu0 %v422, 17
        %v427 = vpop.permute.xlu0 %426
        %428 = vrot.lane.b32.xlu0 %v423, 17
        %v429 = vpop.permute.xlu0 %428
        %vm430 = vcmask 138240
        %v431 = vsel %vm430, %v427, %v429
        %v435 = vsel %vm430, 0.0, %v427
        %v436 = vsel %vm430, %v429, 0.0
        %v437 = vlaneseq
        %v438 = vand.u32 %v437, 127
        %v439 = vadd.s32 %v438, 128
        %vm440 = vcmp.lt.s32.totalorder %v438, 0
        %v441 = vsub.s32 0, %v438
        %v442 = vsel %vm440, %v441, %v438
        %v443 = vshrl.u32 %v442, 4
        %v444 = vand.u32 %v442, 15
        %v445 = vsub.s32 0, %v444
        %v446 = vsel %vm440, %v445, %v444
        %vm447 = vcmp.lt.s32.totalorder %v439, 0
        %v448 = vsub.s32 0, %v439
        %v449 = vsel %vm447, %v448, %v439
        %v450 = vshrl.u32 %v449, 4
        %v451 = vand.u32 %v449, 15
        %v452 = vsub.s32 0, %v451
        %v453 = vsel %vm447, %v452, %v451
        %vm454 = vcmp.ne.s32.totalorder %v446, 0
        %vm455 = vcmp.ne.s32.totalorder %v453, 0
        %vm456 = vcmp.lt.s32.totalorder %v446, 0
        %vm457 = vcmp.lt.s32.totalorder %v453, 0
        %vm458 = vmand %vm456, %vm454
        %vm459 = vmand %vm457, %vm455
        %v460 = vadd.s32 %v446, 16
        %v461 = vadd.s32 %v453, 16
        %v462 = vsel %vm458, %v460, %v446
        %v463 = vsel %vm459, %v461, %v453
        %vm464 = vcmp.ge.s32.totalorder %v462, 1
        %vm465 = vcmp.ge.s32.totalorder %v463, 1
        %vm466 = vcmp.le.s32.totalorder %v462, 14
        %vm467 = vcmp.le.s32.totalorder %v463, 14
        %v468 = vsel %vm464, 1, 0
        %v469 = vsel %vm465, 1, 0
        %vm470 = vcmp.eq.s32.totalorder %v468, 1
        %vm471 = vcmp.eq.s32.totalorder %v469, 1
        %v472 = vsel %vm470, %v435, 0.0
        %v473 = vsel %vm471, %v431, 0.0
        %v474 = vsel %vm466, 1, 0
        %v475 = vsel %vm467, 1, 0
        %vm476 = vcmp.eq.s32.totalorder %v474, 1
        %vm477 = vcmp.eq.s32.totalorder %v475, 1
        %480 = vrot.lane.b32.xlu0 %v435, 126
        %v481 = vpop.permute.xlu0 %480
        %482 = vrot.lane.b32.xlu0 %v431, 126
        %v483 = vpop.permute.xlu0 %482
        %484 = vrot.lane.b32.xlu0 %v436, 126
        %v485 = vpop.permute.xlu0 %484
        %vm486 = vcmask 1031168
        %v487 = vsel %vm486, %v481, %v483
        %v488 = vsel %vm486, %v483, %v485
        %v491 = vsel %vm476, %v487, 0.0
        %v492 = vsel %vm477, %v488, 0.0
        %493 = vrot.lane.b32.xlu0 %v435, 112
        %v494 = vpop.permute.xlu0 %493
        %495 = vrot.lane.b32.xlu0 %v431, 112
        %v496 = vpop.permute.xlu0 %495
        %497 = vrot.lane.b32.xlu0 %v436, 112
        %v498 = vpop.permute.xlu0 %497
        %vm499 = vcmask 916480
        %v500 = vsel %vm499, %v494, %v496
        %v501 = vsel %vm499, %v496, %v498
        %v504 = vsel %vm470, %v500, 0.0
        %v505 = vsel %vm471, %v501, 0.0
        %506 = vrot.lane.b32.xlu0 %v435, 110
        %v507 = vpop.permute.xlu0 %506
        %508 = vrot.lane.b32.xlu0 %v431, 110
        %v509 = vpop.permute.xlu0 %508
        %510 = vrot.lane.b32.xlu0 %v436, 110
        %v511 = vpop.permute.xlu0 %510
        %vm512 = vcmask 900096
        %v513 = vsel %vm512, %v507, %v509
        %v514 = vsel %vm512, %v509, %v511
        %v517 = vsel %vm476, %v513, 0.0
        %v518 = vsel %vm477, %v514, 0.0
        %519 = vrot.lane.b32.xlu0 %v435, 96
        %v520 = vpop.permute.xlu0 %519
        %521 = vrot.lane.b32.xlu0 %v431, 96
        %v522 = vpop.permute.xlu0 %521
        %523 = vrot.lane.b32.xlu0 %v436, 96
        %v524 = vpop.permute.xlu0 %523
        %vm525 = vcmask 785408
        %v526 = vsel %vm525, %v520, %v522
        %v527 = vsel %vm525, %v522, %v524
        %v530 = vsel %vm470, %v526, 0.0
        %v531 = vsel %vm471, %v527, 0.0
        %532 = vrot.lane.b32.xlu0 %v435, 94
        %v533 = vpop.permute.xlu0 %532
        %534 = vrot.lane.b32.xlu0 %v431, 94
        %v535 = vpop.permute.xlu0 %534
        %536 = vrot.lane.b32.xlu0 %v436, 94
        %v537 = vpop.permute.xlu0 %536
        %vm538 = vcmask 769024
        %v539 = vsel %vm538, %v533, %v535
        %v540 = vsel %vm538, %v535, %v537
        %v543 = vsel %vm476, %v539, 0.0
        %v544 = vsel %vm477, %v540, 0.0
        %545 = vrot.lane.b32.xlu0 %v435, 127
        %v546 = vpop.permute.xlu0 %545
        %547 = vrot.lane.b32.xlu0 %v431, 127
        %v548 = vpop.permute.xlu0 %547
        %549 = vrot.lane.b32.xlu0 %v436, 127
        %v550 = vpop.permute.xlu0 %549
        %vm551 = vcmask 1039360
        %v552 = vsel %vm551, %v546, %v548
        %v553 = vsel %vm551, %v548, %v550
        %556 = vrot.lane.b32.xlu0 %v435, 111
        %v557 = vpop.permute.xlu0 %556
        %558 = vrot.lane.b32.xlu0 %v431, 111
        %v559 = vpop.permute.xlu0 %558
        %560 = vrot.lane.b32.xlu0 %v436, 111
        %v561 = vpop.permute.xlu0 %560
        %vm562 = vcmask 908288
        %v563 = vsel %vm562, %v557, %v559
        %v564 = vsel %vm562, %v559, %v561
        %567 = vrot.lane.b32.xlu0 %v435, 95
        %v568 = vpop.permute.xlu0 %567
        %569 = vrot.lane.b32.xlu0 %v431, 95
        %v570 = vpop.permute.xlu0 %569
        %571 = vrot.lane.b32.xlu0 %v436, 95
        %v572 = vpop.permute.xlu0 %571
        %vm573 = vcmask 777216
        %v574 = vsel %vm573, %v568, %v570
        %v575 = vsel %vm573, %v570, %v572
        %v578 = vld [vmem:[%s4] sm:$0xf]
        %v579 = vld [vmem:[%s4 + $0x4] sm:$0xf]
        %v580 = vpack.c.bf16 %v552, %v472
        %v581 = vpack.c.bf16 %v553, %v473
        %v582 = vpack.c.bf16 %v504, %v491
        %v583 = vpack.c.bf16 %v505, %v492
        %v584 = vpack.c.bf16 %v517, %v563
        %v585 = vpack.c.bf16 %v518, %v564
        %v586 = vpack.c.bf16 %v574, %v530
        %v587 = vpack.c.bf16 %v575, %v531
        %v588 = vpack.c.bf16 %v543, %v543
        %v589 = vpack.c.bf16 %v544, %v544
        %v590 = vld [vmem:[%s5] sm:$0xff]
        %v591 = vld [vmem:[%s5 + $0x8] sm:$0xff]
        %593 = vset.pattern.permute.xlu0 0
        %594 = vperm.xlu0 %593, %v590
        %v595 = vpop.permute.xlu0 %594
        %598 = vset.pattern.permute.xlu0 0
        %599 = vperm.xlu0 %598, %v591
        %v600 = vpop.permute.xlu0 %599
        %v604 = vunpack.c.l.b16 %v578
        %v605 = vunpack.c.l.b16 %v579
        %v606 = vpack.c.b16 %v605, %v604
        %vm607 = vcmask 588800
        %v609 = vsel %vm607, %v606, 0
        %vm611 = vcmask 1043456
        %v613 = vsel %vm611, %v588, 0
        %v616 = vsel %vm611, %v589, 0
        %618 = vmatpush.bf16.msra.mxu0 0
        %619 = vmatpush.bf16.msra.mxu0 0
        %620 = vmatpush.bf16.msra.mxu0 0
        %621 = vmatpush.bf16.msra.mxu0 %v613
        %622 = vmatpush.bf16.msra.mxu0 %v586
        %623 = vmatpush.bf16.msra.mxu0 %v584
        %624 = vmatpush.bf16.msra.mxu0 %v582
        %625 = vmatpush.bf16.msra.mxu0 %v580
        %626 = vmatmul.bf16.gmra.mxu0 %v609
        %v627 = vpop.f32.mrf.mxu0
        %v628 = vadd.f32 %v595, %v627
        %v629 = vpop.f32.mrf.mxu0
        %v630 = vadd.f32 %v600, %v629
        %631 = vdwg.mxu0
        %632 = vmatpush.bf16.msra.mxu0 0
        %633 = vmatpush.bf16.msra.mxu0 0
        %634 = vmatpush.bf16.msra.mxu0 0
        %635 = vmatpush.bf16.msra.mxu0 %v616
        %636 = vmatpush.bf16.msra.mxu0 %v587
        %637 = vmatpush.bf16.msra.mxu0 %v585
        %638 = vmatpush.bf16.msra.mxu0 %v583
        %639 = vmatpush.bf16.msra.mxu0 %v581
        %640 = vmatmul.bf16.gmra.mxu0 %v609
        %v641 = vpop.f32.mrf.mxu0
        %v642 = vadd.f32 %v595, %v641
        %v643 = vpop.f32.mrf.mxu0
        %v644 = vadd.f32 %v600, %v643
        %645 = vdwg.mxu0
        %646 = vst [vmem:[%s360] sm:$0xff] %v628
        %647 = vst [vmem:[%s360 + $0x8] sm:$0xff] %v642
        %648 = vst [vmem:[%s360 + $0x10] sm:$0xff] %v630
        %649 = vst [vmem:[%s360 + $0x18] sm:$0xff] %v644
        %s650 = sand.u32 %s176, 1
        %s651 = scalar_lea.sflag [#allocation4], %s650
        %s652 = sand.u32 %s176, 1
        %s653 = smul.addr %s652, 32
        %s654 = scalar_lea.vmem [#allocation10], %s653
        // Predicated region
        $region61: #{tpu_custom_call.1} parent=43 // pred_check
          %p655 = pneg %p186
        $region62: #{tpu_custom_call.1} parent=43 // pred_check_branch
          %657 = sbr.rel (%p655) target = $region64
        $region63: #{tpu_custom_call.1} parent=43 // pred_region
          %659 = vsyncadd %s651, 0
          %s660 = smul.addr %s27, 4
          %s661 = smul.addr %s660, 8
          %s662 = scalar_lea.hbm %s6, %s661
          %s663 = sshll.u32 %s654, 4
          %s664 = int_to_ptr.vmem [resolvable:$true] %s663
          %s665 = sshll.u32 %s662, 4
          %s666 = int_to_ptr.hbm [resolvable:$true] %s665
          %671 = dma.vmem_to_hbm [thread:$0]  %s664, 512, %s666, %s651, 256, 256, 16
        $region64: #{tpu_custom_call.1} parent=43 // pred_fallthru
          _
      $region44: #{tpu_custom_call.1} parent=5 // pred_fallthru
        _
      %p672 = scmp.le.s32.totalorder 2, %s22
      // Predicated region
      $region65: #{tpu_custom_call.1} parent=5 // pred_check
        %p673 = pneg %p672
      $region66: #{tpu_custom_call.1} parent=5 // pred_check_branch
        %675 = sbr.rel (%p673) target = $region68
      $region67: #{tpu_custom_call.1} parent=5 // pred_region
        %s676 = ssub.s32 %s22, 2
        // Predicated region
        $region69: #{tpu_custom_call.1} parent=67 // pred_check
          %p677 = pneg %p192
        $region70: #{tpu_custom_call.1} parent=67 // pred_check_branch
          %679 = sbr.rel (%p677) target = $region72
        $region71: #{tpu_custom_call.1} parent=67 // pred_region
          %s680 = sand.u32 %s177, 1
          %s681 = scalar_lea.sflag [#allocation4], %s680
          %s682 = sand.u32 %s177, 1
          %s683 = smul.addr %s682, 32
          %s684 = scalar_lea.vmem [#allocation10], %s683
          %686 = dma.done %s681, 512
        $region72: #{tpu_custom_call.1} parent=67 // pred_fallthru
          _
      $region68: #{tpu_custom_call.1} parent=5 // pred_fallthru
        _
    $region6: #{tpu_custom_call.1} parent=1 // loop_footer
      %s26 = sadd.s32 1, %s22
    $region7: #{tpu_custom_call.1} parent=1 // loop_footer_branch
      %21 = sbr.rel target = $region3
    $region8: #{tpu_custom_call.1} parent=1 // loop_exit
      _
    %687 = vsyncpa [#allocation3], 1
    %s688 = scalar_lea.sflag [#allocation3], 1
    %689 = vsyncpa %s688, 1
    %690 = vsyncpa [#allocation8], 1
    %s691 = scalar_lea.sflag [#allocation8], 1
    %692 = vsyncpa %s691, 1
    %693 = vsyncpa [#allocation4], 1
    %s694 = scalar_lea.sflag [#allocation4], 1
    %695 = vsyncpa %s694, 1
    %696 = vsyncpa [#allocation5], 1
    %s697 = scalar_lea.sflag [#allocation5], 1
    %698 = vsyncpa %s697, 1

</llo_original>
